<compile_context>
chip_gen: v7x
topology: tpu7x:2x2x1
jax: 0.10.0
libtpu: 0.0.40
codegen_flags: <defaults>
</compile_context>

<pallas_src>
import functools

import jax
import jax.numpy as jnp
from jax.experimental import pallas as pl
from jax.experimental.pallas import tpu as pltpu


def _layernorm_kernel(x_ref, w_ref, b_ref, o_ref, *, eps):
    # Whole (tr, H) tile resident in VMEM.  Reductions run on the XLU, rsqrt
    # on the EUP, the rest on the VPU -- all slots with slack; the kernel is
    # purely HBM-bandwidth bound (one read + one write of the activation).
    x = x_ref[...].astype(jnp.float32)                       # (tr, H)
    u = jnp.mean(x, axis=-1, keepdims=True)                  # (tr, 1)
    ex2 = jnp.mean(x * x, axis=-1, keepdims=True)            # (tr, 1)
    var = jnp.maximum(ex2 - u * u, 0.0)                      # clamp >= 0, f32
    inv = jax.lax.rsqrt(var + eps)                           # eps inside sqrt (TF/BERT)
    y = (x - u) * inv                                        # (tr, H)
    w = w_ref[...].astype(jnp.float32)                       # (1, H)
    b = b_ref[...].astype(jnp.float32)                       # (1, H)
    o_ref[...] = (y * w + b).astype(o_ref.dtype)


def _round_up(x, m):
    return ((x + m - 1) // m) * m


def _tpu_vmem_and_num_cores():
    """Per-TensorCore VMEM capacity and TensorCores-per-chip, with safe fallbacks."""
    vmem_bytes = 128 * 1024 * 1024          # v5e / v6e physical VMEM per TC
    num_cores = 1
    try:
        vmem_bytes = int(pltpu.get_tpu_info().vmem_capacity_bytes)
    except Exception:
        pass
    try:
        kind = jax.devices()[0].device_kind.lower()
        if "v7" in kind:
            num_cores = 2
    except Exception:
        pass
    if vmem_bytes <= 64 * 1024 * 1024:      # 64 MiB / TC => v7x (2 TCs / chip)
        num_cores = max(num_cores, 2)
    return vmem_bytes, num_cores


def _pick_row_tile(rows, H, itemsize, vmem_capacity_bytes, num_cores):
    """Largest sublane-aligned row tile that fits a generation-aware VMEM budget."""
    # Sublane packing: 8 rows for 4-byte dtypes, 16 for bf16, 32 for 1-byte.
    sublane = max(8, 32 // max(itemsize, 1))
    # Tile budget ~= 3/8 of physical per-TC VMEM (24 MiB on v7x, 48 MiB on
    # v5e/v6e): leaves headroom for double-buffered DMA slots + compiler scratch.
    budget = min(vmem_capacity_bytes * 3 // 8, 48 * 1024 * 1024)
    # Per-row bytes: double-buffered input + output in the activation dtype,
    # plus ~2 live f32 temporaries from the fused single-pass variance kernel.
    per_row = H * (4 * itemsize + 2 * 4)
    tr = max(sublane, (budget // max(per_row, 1)) // sublane * sublane)
    # Row cap amortizes the ~0.35us per-grid-step overhead; 2048 is free in
    # VMEM on 128-MiB chips (v5e/v6e), keep 1024 on v7x's 64 MiB.
    row_cap = 1024 if vmem_capacity_bytes <= 64 * 1024 * 1024 else 2048
    tr = min(tr, row_cap)
    tr = min(tr, _round_up(rows, sublane))          # no bigger than the problem
    if num_cores > 1 and rows > 2 * num_cores * sublane:
        # Only on multi-TC chips (v7x): keep >= ~2 grid steps per TensorCore so
        # megacore sharding has work.  On 1-TC chips the grid is a serial loop,
        # so splitting would be pure per-step overhead.
        steps = 2 * num_cores
        tr = min(tr, _round_up(-(-rows // steps), sublane))
    return max(tr, sublane)


def bert_layer_norm(x, weight, bias, eps=1e-12, *, row_tile=None):
    """TF-style LayerNorm over the last axis. x: (..., H); weight/bias: (H,)."""
    orig_shape = x.shape
    H = orig_shape[-1]
    rows = 1
    for d in orig_shape[:-1]:
        rows *= d

    x2 = x.reshape(rows, H)
    w2 = weight.reshape(1, H)
    b2 = bias.reshape(1, H)

    itemsize = jnp.dtype(x.dtype).itemsize
    vmem_cap, num_cores = _tpu_vmem_and_num_cores()
    tr = row_tile if row_tile is not None else _pick_row_tile(
        rows, H, itemsize, vmem_cap, num_cores)

    # No wrapper-side padding/slicing: Pallas handles the partial last block.
    # Its tail rows read unspecified data (harmless: per-row reductions never
    # mix rows) and their writebacks are dropped.
    grid = pl.cdiv(rows, tr)

    # VMEM request: double-buffered in/out tiles in the activation dtype plus
    # ~3 live f32 (tr, H) values (conservative for compiler-internal scratch),
    # 1.5x margin, capped at ~75% of physical per-TC VMEM (48 MiB on v7x).
    tile_bytes = tr * H * (4 * itemsize + 3 * 4) + 2 * H * 4
    vmem_limit = min(vmem_cap * 3 // 4,
                     max(int(1.5 * tile_bytes), 16 * 1024 * 1024))

    # NOTE: for production BERT sizes H (768/1024) is a multiple of 128, so the
    # output slab is lane-dense (unmasked vst).  H < 128 (tiny tests below)
    # still lowers correctly via full-dim blocks, just with masked stores.
    # TODO(synk): fuse the adjacent residual add into this kernel (or emit the
    # LayerNorm as the epilogue of the preceding matmul) to remove an entire
    # extra HBM read+write pass of the (rows, H) activation; out of scope for
    # the standalone BertLayerNorm module.
    out = pl.pallas_call(
        functools.partial(_layernorm_kernel, eps=eps),
        out_shape=jax.ShapeDtypeStruct((rows, H), x.dtype),
        grid_spec=pltpu.PrefetchScalarGridSpec(
            num_scalar_prefetch=0,
            grid=(grid,),
            in_specs=[
                pl.BlockSpec((tr, H), lambda i: (i, 0)),   # activation rows
                pl.BlockSpec((1, H), lambda i: (0, 0)),    # weight (resident)
                pl.BlockSpec((1, H), lambda i: (0, 0)),    # bias   (resident)
            ],
            out_specs=pl.BlockSpec((tr, H), lambda i: (i, 0)),
        ),
        compiler_params=pltpu.CompilerParams(
            dimension_semantics=("parallel",),
            vmem_limit_bytes=vmem_limit,
        ),
    )(x2, w2, b2)

    return out.reshape(orig_shape)


def bert_layer_norm_ref(x, weight, bias, eps=1e-12):
    xf = x.astype(jnp.float32)
    u = jnp.mean(xf, axis=-1, keepdims=True)
    s = jnp.mean((xf - u) ** 2, axis=-1, keepdims=True)
    y = (xf - u) / jnp.sqrt(s + eps)
    return (weight * y + bias).astype(x.dtype)


if __name__ == "__main__":
    key = jax.random.PRNGKey(0)

    # Case 1: small shape consistent with the module; params match torch init
    # (weight=ones, bias=zeros).
    batch, seq, hidden = 2, 8, 32
    x = jax.random.normal(key, (batch, seq, hidden), dtype=jnp.float32)
    weight = jnp.ones((hidden,), dtype=jnp.float32)
    bias = jnp.zeros((hidden,), dtype=jnp.float32)

    out = jax.block_until_ready(bert_layer_norm(x, weight, bias, eps=1e-12))
    ref = bert_layer_norm_ref(x, weight, bias, eps=1e-12)
    assert out.shape == x.shape and out.dtype == x.dtype
    assert jnp.allclose(out, ref, atol=1e-5, rtol=1e-5)

    # Case 2: row count not divisible by the sublane tile (partial last block,
    # grid == 1) with non-trivial affine params.
    k1, k2, k3 = jax.random.split(key, 3)
    x2 = jax.random.normal(k1, (3, 7, 64), dtype=jnp.float32)
    w2 = jax.random.normal(k2, (64,), dtype=jnp.float32)
    b2 = jax.random.normal(k3, (64,), dtype=jnp.float32)

    out2 = jax.block_until_ready(bert_layer_norm(x2, w2, b2, eps=1e-12))
    ref2 = bert_layer_norm_ref(x2, w2, b2, eps=1e-12)
    assert out2.shape == x2.shape and out2.dtype == x2.dtype
    assert jnp.allclose(out2, ref2, atol=1e-5, rtol=1e-5)

    # Case 3: force a small row tile so the grid has multiple steps AND a
    # partial last block (rows=21, tr=8 -> grid=3, last block 5 valid rows).
    out3 = jax.block_until_ready(bert_layer_norm(x2, w2, b2, eps=1e-12,
                                                 row_tile=8))
    assert out3.shape == x2.shape and out3.dtype == x2.dtype
    assert jnp.allclose(out3, ref2, atol=1e-5, rtol=1e-5)

    print("KERNEL_OK")
</pallas_src>

<mosaic_0001>
module attributes {stable_mosaic.version = 11 : i64} {
  func.func @_layernorm_kernel(%arg0: i32, %arg1: memref<16x32xf32, #tpu.memory_space<vmem>>, %arg2: memref<1x32xf32, #tpu.memory_space<vmem>>, %arg3: memref<1x32xf32, #tpu.memory_space<vmem>>, %arg4: memref<16x32xf32, #tpu.memory_space<vmem>>) attributes {dimension_semantics = [#tpu.dimension_semantics<parallel>], iteration_bounds = array<i64: 1>, scalar_prefetch = 0 : i64, scratch_operands = 0 : i64, tpu.core_type = #tpu.core_type<tc>, window_params = [{transform_indices = @transform_0, window_bounds = array<i64: 16, 32>}, {pipeline_mode = #tpu.pipeline_mode<synchronous>, transform_indices = @transform_1, window_bounds = array<i64: 1, 32>}, {pipeline_mode = #tpu.pipeline_mode<synchronous>, transform_indices = @transform_2, window_bounds = array<i64: 1, 32>}, {transform_indices = @transform_3, window_bounds = array<i64: 16, 32>}]} {
    %c0 = arith.constant 0 : index
    %c0_0 = arith.constant 0 : index
    %0 = vector.load %arg1[%c0, %c0_0] : memref<16x32xf32, #tpu.memory_space<vmem>>, vector<16x32xf32>
    %cst = arith.constant dense<0.000000e+00> : vector<16xf32>
    %1 = vector.multi_reduction <add>, %0, %cst [1] : vector<16x32xf32> to vector<16xf32>
    %2 = vector.shape_cast %1 : vector<16xf32> to vector<16x1xf32>
    %cst_1 = arith.constant 3.200000e+01 : f32
    %3 = vector.broadcast %cst_1 : f32 to vector<16x1xf32>
    %4 = arith.divf %2, %3 : vector<16x1xf32>
    %5 = arith.mulf %0, %0 : vector<16x32xf32>
    %cst_2 = arith.constant dense<0.000000e+00> : vector<16xf32>
    %6 = vector.multi_reduction <add>, %5, %cst_2 [1] : vector<16x32xf32> to vector<16xf32>
    %7 = vector.shape_cast %6 : vector<16xf32> to vector<16x1xf32>
    %cst_3 = arith.constant 3.200000e+01 : f32
    %8 = vector.broadcast %cst_3 : f32 to vector<16x1xf32>
    %9 = arith.divf %7, %8 : vector<16x1xf32>
    %10 = arith.mulf %4, %4 : vector<16x1xf32>
    %11 = arith.subf %9, %10 : vector<16x1xf32>
    %cst_4 = arith.constant 0.000000e+00 : f32
    %12 = vector.broadcast %cst_4 : f32 to vector<16x1xf32>
    %13 = arith.maximumf %11, %12 : vector<16x1xf32>
    %cst_5 = arith.constant 9.99999996E-13 : f32
    %14 = vector.broadcast %cst_5 : f32 to vector<16x1xf32>
    %15 = arith.addf %13, %14 : vector<16x1xf32>
    %16 = math.rsqrt %15 : vector<16x1xf32>
    %17 = vector.broadcast %4 : vector<16x1xf32> to vector<16x32xf32>
    %18 = arith.subf %0, %17 : vector<16x32xf32>
    %19 = vector.broadcast %16 : vector<16x1xf32> to vector<16x32xf32>
    %20 = arith.mulf %18, %19 : vector<16x32xf32>
    %c0_6 = arith.constant 0 : index
    %c0_7 = arith.constant 0 : index
    %21 = vector.load %arg2[%c0_6, %c0_7] : memref<1x32xf32, #tpu.memory_space<vmem>>, vector<1x32xf32>
    %c0_8 = arith.constant 0 : index
    %c0_9 = arith.constant 0 : index
    %22 = vector.load %arg3[%c0_8, %c0_9] : memref<1x32xf32, #tpu.memory_space<vmem>>, vector<1x32xf32>
    %23 = vector.broadcast %21 : vector<1x32xf32> to vector<16x32xf32>
    %24 = arith.mulf %20, %23 : vector<16x32xf32>
    %25 = vector.broadcast %22 : vector<1x32xf32> to vector<16x32xf32>
    %26 = arith.addf %24, %25 : vector<16x32xf32>
    %c0_10 = arith.constant 0 : index
    %c0_11 = arith.constant 0 : index
    %27 = vector.load %arg4[%c0_10, %c0_11] : memref<16x32xf32, #tpu.memory_space<vmem>>, vector<16x32xf32>
    tpu.vector_store %arg4[%c0_10, %c0_11], %26 {strides = array<i32>} : memref<16x32xf32, #tpu.memory_space<vmem>>, vector<16x32xf32>,
    return
  }
  func.func @transform_0(%arg0: i32) -> (i32, i32) {
    %c0_i32 = arith.constant 0 : i32
    %c0_i32_0 = arith.constant 0 : i32
    return %arg0, %c0_i32 : i32, i32
  }
  func.func @transform_1(%arg0: i32) -> (i32, i32) {
    %c0_i32 = arith.constant 0 : i32
    %c0_i32_0 = arith.constant 0 : i32
    %c0_i32_1 = arith.constant 0 : i32
    return %c0_i32, %c0_i32_0 : i32, i32
  }
  func.func @transform_2(%arg0: i32) -> (i32, i32) {
    %c0_i32 = arith.constant 0 : i32
    %c0_i32_0 = arith.constant 0 : i32
    %c0_i32_1 = arith.constant 0 : i32
    return %c0_i32, %c0_i32_0 : i32, i32
  }
  func.func @transform_3(%arg0: i32) -> (i32, i32) {
    %c0_i32 = arith.constant 0 : i32
    %c0_i32_0 = arith.constant 0 : i32
    return %arg0, %c0_i32 : i32, i32
  }
}

</mosaic_0001>

<llo_original>
// kernel: tpu_custom_call.1
$region0: #{tpu_custom_call.1}
  #allocation0 [shape = 'u32[]', space=smem, size = 0x4, offset = 0x4, fixed_abs, tag = 'smem constant byte address 0x4 - core index']
  #allocation1 [shape = 'u32[144,128]{1,0:T(1,128)}', space=vmem, size = 0x12000, scoped, tag = 'internal scratch']
  %s0 = inlined_call_operand.hbm [shape: f32[16,32], index: 0, kind: input, shape index: {}]
  %s1 = inlined_call_operand.vmem [shape: f32[1,32], index: 1, kind: input, shape index: {}]
  %s2 = inlined_call_operand.vmem [shape: f32[1,32], index: 2, kind: input, shape index: {}]
  %s3 = inlined_call_operand.hbm [shape: f32[16,32], index: 3, kind: output, shape index: {}]
  %s4 = sld [smem:[#allocation0]]
  $region26: #{tpu_custom_call.1} parent=0
    _
  %s6 = ssub.s32 1, %s4
  %s7 = scalar_select 0, %s6, %s4
  $region1: #{tpu_custom_call.1} parent=0
    #allocation2 [shape = 'u8[8192]{0}', space=vmem, size = 0x2000, scoped, tag = 'input window, operand 0, single buffered']
    #allocation3 [shape = 's32[1]{0}', space=sflag, size = 0x4, scoped, tag = 'scoped memory for tpu_custom_call.1']
    #allocation4 [shape = 's32[1]{0}', space=sflag, size = 0x4, scoped, tag = 'scoped memory for tpu_custom_call.1']
    #allocation5 [shape = 'u8[8192]{0}', space=vmem, size = 0x2000, scoped, tag = 'output window, operand 0, single buffered']
    %8 = vsyncpa [#allocation3], 0
    %9 = vsyncpa [#allocation4], 0
    // Predicated region
    $region2: #{tpu_custom_call.1} parent=1 // pred_check
      _
    $region3: #{tpu_custom_call.1} parent=1 // pred_check_branch
      %11 = sbr.rel (0) target = $region5
    $region4: #{tpu_custom_call.1} parent=1 // pred_region
      %s13 = ssub.s32 256, 256
      %14 = vsyncadd [#allocation3], %s13
      %s15 = sshll.u32 [#allocation2], 4
      %s16 = int_to_ptr.vmem [resolvable:$true] %s15
      %21 = dma.hbm_to_vmem [thread:$0]  %s0, 256, %s16, [#allocation3], 128, 128, 8
    $region5: #{tpu_custom_call.1} parent=1 // pred_fallthru
      _
    // Predicated region
    $region6: #{tpu_custom_call.1} parent=1 // pred_check
      _
    $region7: #{tpu_custom_call.1} parent=1 // pred_check_branch
      %23 = sbr.rel (0) target = $region9
    $region8: #{tpu_custom_call.1} parent=1 // pred_region
      _
    $region9: #{tpu_custom_call.1} parent=1 // pred_fallthru
      _
    // Predicated region
    $region10: #{tpu_custom_call.1} parent=1 // pred_check
      _
    $region11: #{tpu_custom_call.1} parent=1 // pred_check_branch
      %25 = sbr.rel (0) target = $region13
    $region12: #{tpu_custom_call.1} parent=1 // pred_region
      _
    $region13: #{tpu_custom_call.1} parent=1 // pred_fallthru
      _
    // Predicated region
    $region14: #{tpu_custom_call.1} parent=1 // pred_check
      _
    $region15: #{tpu_custom_call.1} parent=1 // pred_check_branch
      %27 = sbr.rel (0) target = $region17
    $region16: #{tpu_custom_call.1} parent=1 // pred_region
      %28 = dma.done [#allocation3], 256
    $region17: #{tpu_custom_call.1} parent=1 // pred_fallthru
      _
    %v29 = vld [vmem:[#allocation2] sm:$0xff]
    %v30 = vld [vmem:[#allocation2 + $0x8] sm:$0xff]
    %vm31 = vcmask 261120
    %v32 = vsel %vm31, %v29, 0.0
    %33 = vadd.xlane.f32.xlu0 %v32
    %v34 = vpop.xlane.xlu0 %33
    %v35 = vsel %vm31, %v30, 0.0
    %36 = vadd.xlane.f32.xlu0 %v35
    %v37 = vpop.xlane.xlu0 %36
    %v38 = vrcp.pop 32.0
    %v39 = vmul.f32 %v34, %v38
    %v40 = vmul.f32 %v37, %v38
    %v41 = vmul.f32 %v29, %v29
    %v42 = vmul.f32 %v30, %v30
    %v43 = vsel %vm31, %v41, 0.0
    %44 = vadd.xlane.f32.xlu0 %v43
    %v45 = vpop.xlane.xlu0 %44
    %v46 = vsel %vm31, %v42, 0.0
    %47 = vadd.xlane.f32.xlu0 %v46
    %v48 = vpop.xlane.xlu0 %47
    %v49 = vmul.f32 %v45, %v38
    %v50 = vmul.f32 %v48, %v38
    %v51 = vmul.f32 %v39, %v39
    %v52 = vmul.f32 %v40, %v40
    %v53 = vsub.f32 %v49, %v51
    %v54 = vsub.f32 %v50, %v52
    %v55 = vmax.f32 %v53, 0.0
    %v56 = vmax.f32 %v54, 0.0
    %v57 = vadd.f32 %v55, 1e-12
    %v58 = vadd.f32 %v56, 1e-12
    %v59 = vrsqrt.pop %v57
    %v60 = vrsqrt.pop %v58
    %v61 = vsub.f32 %v29, %v39
    %v62 = vsub.f32 %v30, %v40
    %v63 = vmul.f32 %v61, %v59
    %v64 = vmul.f32 %v62, %v60
    %v65 = vld [vmem:[%s1] sm:$0x1]
    %v66 = vld [vmem:[%s2] sm:$0x1]
    %v68 = vlaneseq
    %v69 = vshrl.u32 %v68, 7
    %v70 = vsub.s32 0, %v69
    %v71 = vrot.slane %v65, %v70
    %v73 = vmul.f32 %v63, %v71
    %v74 = vmul.f32 %v64, %v71
    %v76 = vlaneseq
    %v77 = vshrl.u32 %v76, 7
    %v78 = vsub.s32 0, %v77
    %v79 = vrot.slane %v66, %v78
    %v81 = vadd.f32 %v73, %v79
    %v82 = vadd.f32 %v74, %v79
    %83 = vst.msk [vmem:[#allocation5] sm:$0xff] %vm31, %v81
    %84 = vst.msk [vmem:[#allocation5 + $0x8] sm:$0xff] %vm31, %v82
    // Predicated region
    $region18: #{tpu_custom_call.1} parent=1 // pred_check
      _
    $region19: #{tpu_custom_call.1} parent=1 // pred_check_branch
      %86 = sbr.rel (0) target = $region21
    $region20: #{tpu_custom_call.1} parent=1 // pred_region
      %s88 = ssub.s32 256, 256
      %89 = vsyncadd [#allocation4], %s88
      %s90 = sshll.u32 [#allocation5], 4
      %s91 = int_to_ptr.vmem [resolvable:$true] %s90
      %96 = dma.vmem_to_hbm [thread:$0]  %s91, 256, %s3, [#allocation4], 128, 128, 8
    $region21: #{tpu_custom_call.1} parent=1 // pred_fallthru
      _
    // Predicated region
    $region22: #{tpu_custom_call.1} parent=1 // pred_check
      _
    $region23: #{tpu_custom_call.1} parent=1 // pred_check_branch
      %98 = sbr.rel (0) target = $region25
    $region24: #{tpu_custom_call.1} parent=1 // pred_region
      %99 = dma.done [#allocation4], 256
    $region25: #{tpu_custom_call.1} parent=1 // pred_fallthru
      _
    %100 = vsyncpa [#allocation3], 1
    %101 = vsyncpa [#allocation4], 1

</llo_original>
